<compile_context>
chip_gen: v7x
topology: tpu7x:2x2x1
jax: 0.10.0
libtpu: 0.0.40
codegen_flags: <defaults>
</compile_context>

<pallas_src>
import jax
import jax.numpy as jnp
import numpy as np
from jax.experimental import pallas as pl
from jax.experimental.pallas import tpu as pltpu


# --------------------------------------------------------------------------- #
# Kernel
# --------------------------------------------------------------------------- #
def _vae_kernel(x_ref, eps_ref,
                w1_ref, b1_ref, w2_ref, b2_ref, w3_ref, b3_ref,
                w4_ref, b4_ref, w5_ref, b5_ref, w6_ref, b6_ref,
                xrec_ref, mu_ref, logvar_ref, z_ref):
    """Whole VAE forward: encoder MLP -> reparameterize -> decoder MLP."""
    l_p = mu_ref.shape[-1]  # padded latent width (multiple of 128)

    def mm(act, w_ref):
        # bf16 operands for the MXU, f32 accumulation.
        return jnp.dot(act.astype(jnp.bfloat16), w_ref[...],
                       preferred_element_type=jnp.float32)

    x = x_ref[...]  # already bf16

    # ---- encoder: Linear -> ReLU -> Linear -> ReLU -> fused (mu | log_var) --
    h = jnp.maximum(mm(x, w1_ref) + b1_ref[...], 0.0)
    h = jnp.maximum(mm(h, w2_ref) + b2_ref[...], 0.0)
    ml = mm(h, w3_ref) + b3_ref[...]          # (tb, 2*l_p), single MXU pass
    mu = ml[:, :l_p]                          # lane-tile-aligned slice (free)
    log_var = ml[:, l_p:]
    # store as soon as available -> shorter live ranges across the decoder
    mu_ref[...] = mu
    logvar_ref[...] = log_var

    # ---- reparameterization (f32): z = mu + eps * exp(0.5 * log_var) --------
    z = mu + eps_ref[...] * jnp.exp(0.5 * log_var)
    z_ref[...] = z

    # ---- decoder: Linear -> ReLU -> Linear -> ReLU -> Linear ----------------
    d = jnp.maximum(mm(z, w4_ref) + b4_ref[...], 0.0)
    d = jnp.maximum(mm(d, w5_ref) + b5_ref[...], 0.0)
    xrec_ref[...] = mm(d, w6_ref) + b6_ref[...]


# --------------------------------------------------------------------------- #
# Wrapper helpers
# --------------------------------------------------------------------------- #
def _round_up(n, m):
    return ((n + m - 1) // m) * m


def _pad2(a, rows, cols):
    r, c = a.shape
    return jnp.pad(a, ((0, rows - r), (0, cols - c)))


def _vmem_capacity_bytes():
    """Per-generation VMEM capacity; v7x-safe fallback if the query fails."""
    try:
        cap = int(pltpu.get_tpu_info().vmem_capacity_bytes)
        if cap > 0:
            return cap
    except Exception:
        pass
    return 64 << 20  # v7x physical VMEM (smallest of v5e/v6e/v7x)


def _choose_batch_tile(requested, per_row_bytes, resident_bytes, budget_bytes,
                       floor=128):
    """Largest batch tile (multiple of 128, floored at 128 so the MXU M-dim
    stays useful) whose double-buffered activations + resident weights fit."""
    tb = max(floor, (min(requested, 1024) // 128) * 128)
    while tb > floor and resident_bytes + 2 * tb * per_row_bytes > budget_bytes:
        tb -= 128
    return tb


def _cost_estimate(b, in_p, h_p, l_p, weight_bytes):
    flops = 2 * b * (in_p * h_p + h_p * h_p + h_p * (2 * l_p)
                     + l_p * h_p + h_p * h_p + h_p * in_p)
    transcendentals = b * l_p
    bytes_accessed = (b * in_p * 2            # x (bf16)
                      + b * l_p * 4           # eps
                      + weight_bytes          # resident weights
                      + b * (in_p + 3 * l_p) * 4)   # outputs
    return pl.CostEstimate(flops=flops, transcendentals=transcendentals,
                           bytes_accessed=bytes_accessed)


# --------------------------------------------------------------------------- #
# Public forward
# --------------------------------------------------------------------------- #
def vae_forward(x, eps, params, *, batch_tile=256):
    """Fused VAE forward. Returns (x_recon, mu, log_var, z) in float32.

    params: dict with w1..w6 stored as (in_features, out_features) and
    b1..b6 as (1, out_features), all float32.
    """
    B, input_dim = x.shape
    latent_dim = eps.shape[1]
    hidden_dim = params["w1"].shape[1]

    in_p = _round_up(input_dim, 128)    # lane-dense reconstruction width
    l_p = _round_up(latent_dim, 128)    # lane-dense latent width
    h_p = _round_up(hidden_dim, 128)    # lane-dense hidden width

    bf16, f32 = jnp.bfloat16, jnp.float32

    # ---- weight prep: pad hidden/latent/recon dims, fuse the mu/log_var head,
    #      cast matmul operands to bf16 (biases stay f32) ---------------------
    w1 = _pad2(params["w1"], input_dim, h_p).astype(bf16)      # K left raw
    b1 = _pad2(params["b1"], 1, h_p).astype(f32)
    w2 = _pad2(params["w2"], h_p, h_p).astype(bf16)
    b2 = _pad2(params["b2"], 1, h_p).astype(f32)
    w3_raw, b3_raw = params["w3"], params["b3"]
    w3 = jnp.concatenate(
        [_pad2(w3_raw[:, :latent_dim], h_p, l_p),               # mu half
         _pad2(w3_raw[:, latent_dim:], h_p, l_p)], axis=1       # log_var half
    ).astype(bf16)                                              # (h_p, 2*l_p)
    b3 = jnp.concatenate(
        [_pad2(b3_raw[:, :latent_dim], 1, l_p),
         _pad2(b3_raw[:, latent_dim:], 1, l_p)], axis=1).astype(f32)
    w4 = _pad2(params["w4"], l_p, h_p).astype(bf16)
    b4 = _pad2(params["b4"], 1, h_p).astype(f32)
    w5 = _pad2(params["w5"], h_p, h_p).astype(bf16)
    b5 = _pad2(params["b5"], 1, h_p).astype(f32)
    w6 = _pad2(params["w6"], h_p, in_p).astype(bf16)
    b6 = _pad2(params["b6"], 1, in_p).astype(f32)
    weights = (w1, b1, w2, b2, w3, b3, w4, b4, w5, b5, w6, b6)
    weight_bytes = sum(int(w.size) * w.dtype.itemsize for w in weights)

    vmem_cap = _vmem_capacity_bytes()
    budget = int(0.75 * vmem_cap)

    out_dtypes = (f32, f32, f32, f32)
    b8 = _round_up(B, 8)

    # 1-tile batches: single no-grid call (everything VMEM-resident).  Larger
    # batches take the grid path so v7x's two TensorCores both get tiles.
    if b8 <= 128:
        b_pad = b8
        x_p = _pad2(x.astype(bf16), b_pad, input_dim)           # batch pad only
        eps_p = _pad2(eps.astype(f32), b_pad, l_p)

        out_shapes = tuple(
            jax.ShapeDtypeStruct(s, d) for s, d in zip(
                ((b_pad, in_p), (b_pad, l_p), (b_pad, l_p), (b_pad, l_p)),
                out_dtypes))
        need = (weight_bytes
                + x_p.size * x_p.dtype.itemsize
                + eps_p.size * eps_p.dtype.itemsize
                + sum(int(np.prod(s.shape)) * 4 for s in out_shapes)
                + (4 << 20))
        vmem_limit = int(min(max(need, 32 << 20), int(0.9 * vmem_cap)))

        vmem = pl.BlockSpec(memory_space=pltpu.MemorySpace.VMEM)
        outs = jax.block_until_ready(pl.pallas_call(
            _vae_kernel,
            out_shape=out_shapes,
            in_specs=[vmem] * (2 + len(weights)),
            out_specs=tuple([vmem] * 4),
            compiler_params=pltpu.CompilerParams(vmem_limit_bytes=vmem_limit),
            cost_estimate=_cost_estimate(b_pad, in_p, h_p, l_p, weight_bytes),
        )(x_p, eps_p, *weights))
    else:
        # ---- batch-tiled grid: stream activations, weights resident --------
        # VMEM bytes per batch row of streamed/double-buffered activations
        # (accounted at padded lane layout).
        per_row = 2 * in_p + 4 * l_p + 4 * in_p + 3 * 4 * l_p
        # aim for >=2 grid steps (both v7x TCs) when the batch allows it
        target_tb = min(batch_tile, max(128, _round_up(pl.cdiv(b8, 2), 128)))
        tb = _choose_batch_tile(target_tb, per_row, 2 * weight_bytes, budget)
        b_pad = _round_up(B, tb)

        x_p = _pad2(x.astype(bf16), b_pad, input_dim)           # batch pad only
        eps_p = _pad2(eps.astype(f32), b_pad, l_p)

        def tile_spec(feat):
            return pl.BlockSpec((tb, feat), lambda i: (i, 0))

        out_specs = (tile_spec(in_p), tile_spec(l_p),
                     tile_spec(l_p), tile_spec(l_p))
        out_shapes = tuple(
            jax.ShapeDtypeStruct(s, d) for s, d in zip(
                ((b_pad, in_p), (b_pad, l_p), (b_pad, l_p), (b_pad, l_p)),
                out_dtypes))

        cost = _cost_estimate(b_pad, in_p, h_p, l_p, weight_bytes)

        def build_and_call(single_buffer_weights):
            # Weights have a constant index_map; single-buffer them so they
            # are not pointlessly double-buffered (halves weight VMEM).
            if single_buffer_weights:
                res_kw = dict(pipeline_mode=pl.Buffered(1))
                w_bufs = 1
            else:
                res_kw = {}
                w_bufs = 2

            def resident_spec(shape):
                return pl.BlockSpec(shape, lambda i: (0, 0), **res_kw)

            in_specs = ([tile_spec(input_dim), tile_spec(l_p)]
                        + [resident_spec(w.shape) for w in weights])
            need = w_bufs * weight_bytes + 2 * tb * per_row + (4 << 20)
            vmem_limit = int(min(max(need, 32 << 20), int(0.9 * vmem_cap)))
            return jax.block_until_ready(pl.pallas_call(
                _vae_kernel,
                out_shape=out_shapes,
                grid=(b_pad // tb,),
                in_specs=in_specs,
                out_specs=out_specs,
                compiler_params=pltpu.CompilerParams(
                    dimension_semantics=("parallel",),
                    vmem_limit_bytes=vmem_limit),
                cost_estimate=cost,
            )(x_p, eps_p, *weights))

        try:
            outs = build_and_call(True)
        except Exception:
            # pipeline_mode=Buffered(1) not supported on this runtime ->
            # fall back to default double-buffered weights.
            outs = build_and_call(False)

    x_recon, mu, log_var, z = outs
    return (x_recon[:B, :input_dim], mu[:B, :latent_dim],
            log_var[:B, :latent_dim], z[:B, :latent_dim])


# --------------------------------------------------------------------------- #
# Parameters / reference
# --------------------------------------------------------------------------- #
def init_params(key, input_dim, hidden_dim, latent_dim):
    """Deterministic synthetic init. Weights (in, out), biases (1, out)."""
    dims = [
        ("w1", "b1", input_dim, hidden_dim),
        ("w2", "b2", hidden_dim, hidden_dim),
        ("w3", "b3", hidden_dim, 2 * latent_dim),
        ("w4", "b4", latent_dim, hidden_dim),
        ("w5", "b5", hidden_dim, hidden_dim),
        ("w6", "b6", hidden_dim, input_dim),
    ]
    params = {}
    for wname, bname, din, dout in dims:
        key, kw, kb = jax.random.split(key, 3)
        bound = 1.0 / np.sqrt(din)   # torch.nn.Linear default range
        params[wname] = jax.random.uniform(
            kw, (din, dout), jnp.float32, minval=-bound, maxval=bound)
        params[bname] = jax.random.uniform(
            kb, (1, dout), jnp.float32, minval=-bound, maxval=bound)
    return params


def _reference_forward(x, eps, p):
    """Pure-JAX reference mirroring the kernel numerics
    (bf16 MXU operands, f32 accumulation and elementwise math)."""
    def mm(a, w):
        return jnp.dot(a.astype(jnp.bfloat16), w.astype(jnp.bfloat16),
                       preferred_element_type=jnp.float32)
    relu = lambda a: jnp.maximum(a, 0.0)
    h = relu(mm(x, p["w1"]) + p["b1"])
    h = relu(mm(h, p["w2"]) + p["b2"])
    ml = mm(h, p["w3"]) + p["b3"]
    L = eps.shape[1]
    mu, log_var = ml[:, :L], ml[:, L:]
    z = mu + eps * jnp.exp(0.5 * log_var)
    d = relu(mm(z, p["w4"]) + p["b4"])
    d = relu(mm(d, p["w5"]) + p["b5"])
    x_recon = mm(d, p["w6"]) + p["b6"]
    return x_recon, mu, log_var, z


if __name__ == "__main__":
    input_dim, hidden_dim, latent_dim = 16, 32, 8

    key = jax.random.PRNGKey(0)
    key, kp = jax.random.split(key)
    params = init_params(kp, input_dim, hidden_dim, latent_dim)

    # batch=8 exercises the single-shot (no grid) path; batch=512 exercises
    # the batch-tiled grid with VMEM-resident weights and "parallel" batch.
    for batch in (8, 512):
        key, kx, keps = jax.random.split(key, 3)
        x = jax.random.normal(kx, (batch, input_dim), jnp.float32)
        eps = jax.random.normal(keps, (batch, latent_dim), jnp.float32)

        outs = vae_forward(x, eps, params, batch_tile=256)
        jax.block_until_ready(outs)

        ref = _reference_forward(x, eps, params)
        for got, want in zip(outs, ref):
            np.testing.assert_allclose(np.asarray(got), np.asarray(want),
                                       rtol=1e-2, atol=1e-2)

    print("KERNEL_OK")
</pallas_src>

<mosaic_0001>
module attributes {stable_mosaic.version = 11 : i64} {
  func.func @_vae_kernel(%arg0: memref<8x16xbf16, #tpu.memory_space<vmem>>, %arg1: memref<8x128xf32, #tpu.memory_space<vmem>>, %arg2: memref<16x128xbf16, #tpu.memory_space<vmem>>, %arg3: memref<1x128xf32, #tpu.memory_space<vmem>>, %arg4: memref<128x128xbf16, #tpu.memory_space<vmem>>, %arg5: memref<1x128xf32, #tpu.memory_space<vmem>>, %arg6: memref<128x256xbf16, #tpu.memory_space<vmem>>, %arg7: memref<1x256xf32, #tpu.memory_space<vmem>>, %arg8: memref<128x128xbf16, #tpu.memory_space<vmem>>, %arg9: memref<1x128xf32, #tpu.memory_space<vmem>>, %arg10: memref<128x128xbf16, #tpu.memory_space<vmem>>, %arg11: memref<1x128xf32, #tpu.memory_space<vmem>>, %arg12: memref<128x128xbf16, #tpu.memory_space<vmem>>, %arg13: memref<1x128xf32, #tpu.memory_space<vmem>>, %arg14: memref<8x128xf32, #tpu.memory_space<vmem>>, %arg15: memref<8x128xf32, #tpu.memory_space<vmem>>, %arg16: memref<8x128xf32, #tpu.memory_space<vmem>>, %arg17: memref<8x128xf32, #tpu.memory_space<vmem>>) attributes {dimension_semantics = [], scalar_prefetch = 0 : i64, scratch_operands = 0 : i64, tpu.core_type = #tpu.core_type<tc>} {
    %c0 = arith.constant 0 : index
    %c0_0 = arith.constant 0 : index
    %0 = vector.load %arg0[%c0, %c0_0] : memref<8x16xbf16, #tpu.memory_space<vmem>>, vector<8x16xbf16>
    %c0_1 = arith.constant 0 : index
    %c0_2 = arith.constant 0 : index
    %1 = vector.load %arg2[%c0_1, %c0_2] : memref<16x128xbf16, #tpu.memory_space<vmem>>, vector<16x128xbf16>
    %cst = arith.constant dense<0.000000e+00> : vector<8x128xf32>
    %2 = tpu.matmul %0, %1, %cst {dimension_numbers = #tpu.dot_dimension_numbers<[1], [0], [0], [1], [0, 0, 1, 1], [], []>} : vector<8x16xbf16>, vector<16x128xbf16>, vector<8x128xf32> -> vector<8x128xf32>
    %c0_3 = arith.constant 0 : index
    %c0_4 = arith.constant 0 : index
    %3 = vector.load %arg3[%c0_3, %c0_4] : memref<1x128xf32, #tpu.memory_space<vmem>>, vector<1x128xf32>
    %4 = vector.broadcast %3 : vector<1x128xf32> to vector<8x128xf32>
    %5 = arith.addf %2, %4 : vector<8x128xf32>
    %cst_5 = arith.constant 0.000000e+00 : f32
    %6 = vector.broadcast %cst_5 : f32 to vector<8x128xf32>
    %7 = arith.maximumf %5, %6 : vector<8x128xf32>
    %8 = arith.truncf %7 : vector<8x128xf32> to vector<8x128xbf16>
    %c0_6 = arith.constant 0 : index
    %c0_7 = arith.constant 0 : index
    %9 = vector.load %arg4[%c0_6, %c0_7] : memref<128x128xbf16, #tpu.memory_space<vmem>>, vector<128x128xbf16>
    %cst_8 = arith.constant dense<0.000000e+00> : vector<8x128xf32>
    %10 = tpu.matmul %8, %9, %cst_8 {dimension_numbers = #tpu.dot_dimension_numbers<[1], [0], [0], [1], [0, 0, 1, 1], [], []>} : vector<8x128xbf16>, vector<128x128xbf16>, vector<8x128xf32> -> vector<8x128xf32>
    %c0_9 = arith.constant 0 : index
    %c0_10 = arith.constant 0 : index
    %11 = vector.load %arg5[%c0_9, %c0_10] : memref<1x128xf32, #tpu.memory_space<vmem>>, vector<1x128xf32>
    %12 = vector.broadcast %11 : vector<1x128xf32> to vector<8x128xf32>
    %13 = arith.addf %10, %12 : vector<8x128xf32>
    %cst_11 = arith.constant 0.000000e+00 : f32
    %14 = vector.broadcast %cst_11 : f32 to vector<8x128xf32>
    %15 = arith.maximumf %13, %14 : vector<8x128xf32>
    %16 = arith.truncf %15 : vector<8x128xf32> to vector<8x128xbf16>
    %c0_12 = arith.constant 0 : index
    %c0_13 = arith.constant 0 : index
    %17 = vector.load %arg6[%c0_12, %c0_13] : memref<128x256xbf16, #tpu.memory_space<vmem>>, vector<128x256xbf16>
    %cst_14 = arith.constant dense<0.000000e+00> : vector<8x256xf32>
    %18 = tpu.matmul %16, %17, %cst_14 {dimension_numbers = #tpu.dot_dimension_numbers<[1], [0], [0], [1], [0, 0, 1, 1], [], []>} : vector<8x128xbf16>, vector<128x256xbf16>, vector<8x256xf32> -> vector<8x256xf32>
    %c0_15 = arith.constant 0 : index
    %c0_16 = arith.constant 0 : index
    %19 = vector.load %arg7[%c0_15, %c0_16] : memref<1x256xf32, #tpu.memory_space<vmem>>, vector<1x256xf32>
    %20 = vector.broadcast %19 : vector<1x256xf32> to vector<8x256xf32>
    %21 = arith.addf %18, %20 : vector<8x256xf32>
    %22 = vector.extract_strided_slice %21 {offsets = [0, 0], sizes = [8, 128], strides = [1, 1]} : vector<8x256xf32> to vector<8x128xf32>
    %23 = vector.extract_strided_slice %21 {offsets = [0, 128], sizes = [8, 128], strides = [1, 1]} : vector<8x256xf32> to vector<8x128xf32>
    %c0_17 = arith.constant 0 : index
    %c0_18 = arith.constant 0 : index
    %24 = vector.load %arg15[%c0_17, %c0_18] : memref<8x128xf32, #tpu.memory_space<vmem>>, vector<8x128xf32>
    tpu.vector_store %arg15[%c0_17, %c0_18], %22 {strides = array<i32>} : memref<8x128xf32, #tpu.memory_space<vmem>>, vector<8x128xf32>,
    %c0_19 = arith.constant 0 : index
    %c0_20 = arith.constant 0 : index
    %25 = vector.load %arg16[%c0_19, %c0_20] : memref<8x128xf32, #tpu.memory_space<vmem>>, vector<8x128xf32>
    tpu.vector_store %arg16[%c0_19, %c0_20], %23 {strides = array<i32>} : memref<8x128xf32, #tpu.memory_space<vmem>>, vector<8x128xf32>,
    %c0_21 = arith.constant 0 : index
    %c0_22 = arith.constant 0 : index
    %26 = vector.load %arg1[%c0_21, %c0_22] : memref<8x128xf32, #tpu.memory_space<vmem>>, vector<8x128xf32>
    %cst_23 = arith.constant 5.000000e-01 : f32
    %27 = vector.broadcast %cst_23 : f32 to vector<8x128xf32>
    %28 = arith.mulf %27, %23 : vector<8x128xf32>
    %29 = math.exp %28 : vector<8x128xf32>
    %30 = arith.mulf %26, %29 : vector<8x128xf32>
    %31 = arith.addf %22, %30 : vector<8x128xf32>
    %c0_24 = arith.constant 0 : index
    %c0_25 = arith.constant 0 : index
    %32 = vector.load %arg17[%c0_24, %c0_25] : memref<8x128xf32, #tpu.memory_space<vmem>>, vector<8x128xf32>
    tpu.vector_store %arg17[%c0_24, %c0_25], %31 {strides = array<i32>} : memref<8x128xf32, #tpu.memory_space<vmem>>, vector<8x128xf32>,
    %33 = arith.truncf %31 : vector<8x128xf32> to vector<8x128xbf16>
    %c0_26 = arith.constant 0 : index
    %c0_27 = arith.constant 0 : index
    %34 = vector.load %arg8[%c0_26, %c0_27] : memref<128x128xbf16, #tpu.memory_space<vmem>>, vector<128x128xbf16>
    %cst_28 = arith.constant dense<0.000000e+00> : vector<8x128xf32>
    %35 = tpu.matmul %33, %34, %cst_28 {dimension_numbers = #tpu.dot_dimension_numbers<[1], [0], [0], [1], [0, 0, 1, 1], [], []>} : vector<8x128xbf16>, vector<128x128xbf16>, vector<8x128xf32> -> vector<8x128xf32>
    %c0_29 = arith.constant 0 : index
    %c0_30 = arith.constant 0 : index
    %36 = vector.load %arg9[%c0_29, %c0_30] : memref<1x128xf32, #tpu.memory_space<vmem>>, vector<1x128xf32>
    %37 = vector.broadcast %36 : vector<1x128xf32> to vector<8x128xf32>
    %38 = arith.addf %35, %37 : vector<8x128xf32>
    %cst_31 = arith.constant 0.000000e+00 : f32
    %39 = vector.broadcast %cst_31 : f32 to vector<8x128xf32>
    %40 = arith.maximumf %38, %39 : vector<8x128xf32>
    %41 = arith.truncf %40 : vector<8x128xf32> to vector<8x128xbf16>
    %c0_32 = arith.constant 0 : index
    %c0_33 = arith.constant 0 : index
    %42 = vector.load %arg10[%c0_32, %c0_33] : memref<128x128xbf16, #tpu.memory_space<vmem>>, vector<128x128xbf16>
    %cst_34 = arith.constant dense<0.000000e+00> : vector<8x128xf32>
    %43 = tpu.matmul %41, %42, %cst_34 {dimension_numbers = #tpu.dot_dimension_numbers<[1], [0], [0], [1], [0, 0, 1, 1], [], []>} : vector<8x128xbf16>, vector<128x128xbf16>, vector<8x128xf32> -> vector<8x128xf32>
    %c0_35 = arith.constant 0 : index
    %c0_36 = arith.constant 0 : index
    %44 = vector.load %arg11[%c0_35, %c0_36] : memref<1x128xf32, #tpu.memory_space<vmem>>, vector<1x128xf32>
    %45 = vector.broadcast %44 : vector<1x128xf32> to vector<8x128xf32>
    %46 = arith.addf %43, %45 : vector<8x128xf32>
    %cst_37 = arith.constant 0.000000e+00 : f32
    %47 = vector.broadcast %cst_37 : f32 to vector<8x128xf32>
    %48 = arith.maximumf %46, %47 : vector<8x128xf32>
    %49 = arith.truncf %48 : vector<8x128xf32> to vector<8x128xbf16>
    %c0_38 = arith.constant 0 : index
    %c0_39 = arith.constant 0 : index
    %50 = vector.load %arg12[%c0_38, %c0_39] : memref<128x128xbf16, #tpu.memory_space<vmem>>, vector<128x128xbf16>
    %cst_40 = arith.constant dense<0.000000e+00> : vector<8x128xf32>
    %51 = tpu.matmul %49, %50, %cst_40 {dimension_numbers = #tpu.dot_dimension_numbers<[1], [0], [0], [1], [0, 0, 1, 1], [], []>} : vector<8x128xbf16>, vector<128x128xbf16>, vector<8x128xf32> -> vector<8x128xf32>
    %c0_41 = arith.constant 0 : index
    %c0_42 = arith.constant 0 : index
    %52 = vector.load %arg13[%c0_41, %c0_42] : memref<1x128xf32, #tpu.memory_space<vmem>>, vector<1x128xf32>
    %53 = vector.broadcast %52 : vector<1x128xf32> to vector<8x128xf32>
    %54 = arith.addf %51, %53 : vector<8x128xf32>
    %c0_43 = arith.constant 0 : index
    %c0_44 = arith.constant 0 : index
    %55 = vector.load %arg14[%c0_43, %c0_44] : memref<8x128xf32, #tpu.memory_space<vmem>>, vector<8x128xf32>
    tpu.vector_store %arg14[%c0_43, %c0_44], %54 {strides = array<i32>} : memref<8x128xf32, #tpu.memory_space<vmem>>, vector<8x128xf32>,
    return
  }
}

</mosaic_0001>

<llo_original>
// kernel: tpu_custom_call.1
$region0: #{tpu_custom_call.1}
  #allocation0 [shape = 'u32[]', space=smem, size = 0x4, offset = 0x4, fixed_abs, tag = 'smem constant byte address 0x4 - core index']
  #allocation1 [shape = 'u32[144,128]{1,0:T(1,128)}', space=vmem, size = 0x12000, scoped, tag = 'internal scratch']
  %s0 = inlined_call_operand.hbm [shape: bf16[8,16], index: 0, kind: input, shape index: {}]
  %s1 = inlined_call_operand.hbm [shape: f32[8,128], index: 1, kind: input, shape index: {}]
  %s2 = inlined_call_operand.hbm [shape: bf16[16,128], index: 2, kind: input, shape index: {}]
  %s3 = inlined_call_operand.vmem [shape: f32[1,128], index: 3, kind: input, shape index: {}]
  %s4 = inlined_call_operand.hbm [shape: bf16[128,128], index: 4, kind: input, shape index: {}]
  %s5 = inlined_call_operand.vmem [shape: f32[1,128], index: 5, kind: input, shape index: {}]
  %s6 = inlined_call_operand.hbm [shape: bf16[128,256], index: 6, kind: input, shape index: {}]
  %s7 = inlined_call_operand.vmem [shape: f32[1,256], index: 7, kind: input, shape index: {}]
  %s8 = inlined_call_operand.hbm [shape: bf16[128,128], index: 8, kind: input, shape index: {}]
  %s9 = inlined_call_operand.vmem [shape: f32[1,128], index: 9, kind: input, shape index: {}]
  %s10 = inlined_call_operand.hbm [shape: bf16[128,128], index: 10, kind: input, shape index: {}]
  %s11 = inlined_call_operand.vmem [shape: f32[1,128], index: 11, kind: input, shape index: {}]
  %s12 = inlined_call_operand.hbm [shape: bf16[128,128], index: 12, kind: input, shape index: {}]
  %s13 = inlined_call_operand.vmem [shape: f32[1,128], index: 13, kind: input, shape index: {}]
  %s14 = inlined_call_operand.hbm [shape: f32[8,128], index: 14, kind: output, shape index: {0}]
  %s15 = inlined_call_operand.hbm [shape: f32[8,128], index: 15, kind: output, shape index: {1}]
  %s16 = inlined_call_operand.hbm [shape: f32[8,128], index: 16, kind: output, shape index: {2}]
  %s17 = inlined_call_operand.hbm [shape: f32[8,128], index: 17, kind: output, shape index: {3}]
  %18 = xla_tuple %s14, %s15, %s16, %s17
  %s19 = sld [smem:[#allocation0]]
  $region122: #{tpu_custom_call.1} parent=0
    _
  %s21 = ssub.s32 1, %s19
  %s22 = scalar_select 0, %s21, %s19
  $region1: #{tpu_custom_call.1} parent=0
    #allocation2 [shape = 'u8[2048]{0}', space=vmem, size = 0x800, scoped, tag = 'input window, operand 0, single buffered']
    #allocation3 [shape = 's32[1]{0}', space=sflag, size = 0x4, scoped, tag = 'scoped memory for tpu_custom_call.1']
    #allocation4 [shape = 's32[1]{0}', space=sflag, size = 0x4, scoped, tag = 'scoped memory for tpu_custom_call.1']
    #allocation5 [shape = 'u8[4096]{0}', space=vmem, size = 0x1000, scoped, tag = 'input window, operand 1, single buffered']
    #allocation6 [shape = 's32[1]{0}', space=sflag, size = 0x4, scoped, tag = 'scoped memory for tpu_custom_call.1']
    #allocation7 [shape = 'u8[4096]{0}', space=vmem, size = 0x1000, scoped, tag = 'input window, operand 2, single buffered']
    #allocation8 [shape = 'u8[32768]{0}', space=vmem, size = 0x8000, scoped, tag = 'input window, operand 4, single buffered']
    #allocation9 [shape = 's32[1]{0}', space=sflag, size = 0x4, scoped, tag = 'scoped memory for tpu_custom_call.1']
    #allocation10 [shape = 'u8[65536]{0}', space=vmem, size = 0x10000, scoped, tag = 'input window, operand 6, single buffered']
    #allocation11 [shape = 'u8[32768]{0}', space=vmem, size = 0x8000, scoped, tag = 'input window, operand 8, single buffered']
    #allocation12 [shape = 's32[1]{0}', space=sflag, size = 0x4, scoped, tag = 'scoped memory for tpu_custom_call.1']
    #allocation13 [shape = 'u8[32768]{0}', space=vmem, size = 0x8000, scoped, tag = 'input window, operand 10, single buffered']
    #allocation14 [shape = 'u8[32768]{0}', space=vmem, size = 0x8000, scoped, tag = 'input window, operand 12, single buffered']
    #allocation15 [shape = 's32[1]{0}', space=sflag, size = 0x4, scoped, tag = 'scoped memory for tpu_custom_call.1']
    #allocation16 [shape = 'u8[4096]{0}', space=vmem, size = 0x1000, scoped, tag = 'output window, operand 0, single buffered']
    #allocation17 [shape = 'u8[4096]{0}', space=vmem, size = 0x1000, scoped, tag = 'output window, operand 1, single buffered']
    #allocation18 [shape = 's32[1]{0}', space=sflag, size = 0x4, scoped, tag = 'scoped memory for tpu_custom_call.1']
    #allocation19 [shape = 'u8[4096]{0}', space=vmem, size = 0x1000, scoped, tag = 'output window, operand 2, single buffered']
    #allocation20 [shape = 'u8[4096]{0}', space=vmem, size = 0x1000, scoped, tag = 'output window, operand 3, single buffered']
    #allocation21 [shape = 's32[1]{0}', space=sflag, size = 0x4, scoped, tag = 'scoped memory for tpu_custom_call.1']
    %23 = vsyncpa [#allocation3], 0
    %24 = vsyncpa [#allocation6], 0
    %25 = vsyncpa [#allocation9], 0
    %26 = vsyncpa [#allocation12], 0
    %27 = vsyncpa [#allocation15], 0
    %28 = vsyncpa [#allocation4], 0
    %29 = vsyncpa [#allocation18], 0
    %30 = vsyncpa [#allocation21], 0
    // Predicated region
    $region2: #{tpu_custom_call.1} parent=1 // pred_check
      _
    $region3: #{tpu_custom_call.1} parent=1 // pred_check_branch
      %32 = sbr.rel (0) target = $region5
    $region4: #{tpu_custom_call.1} parent=1 // pred_region
      %s34 = ssub.s32 64, 64
      %35 = vsyncadd [#allocation3], %s34
      %s37 = sshll.u32 [#allocation2], 4
      %s38 = int_to_ptr.vmem [resolvable:$true] %s37
      %40 = dma.hbm_to_vmem [thread:$0]  %s0, 64, %s38, [#allocation3]
    $region5: #{tpu_custom_call.1} parent=1 // pred_fallthru
      _
    // Predicated region
    $region6: #{tpu_custom_call.1} parent=1 // pred_check
      _
    $region7: #{tpu_custom_call.1} parent=1 // pred_check_branch
      %42 = sbr.rel (0) target = $region9
    $region8: #{tpu_custom_call.1} parent=1 // pred_region
      %s44 = ssub.s32 128, 128
      %45 = vsyncadd [#allocation6], %s44
      %s47 = sshll.u32 [#allocation5], 4
      %s48 = int_to_ptr.vmem [resolvable:$true] %s47
      %50 = dma.hbm_to_vmem [thread:$0]  %s1, 128, %s48, [#allocation6]
    $region9: #{tpu_custom_call.1} parent=1 // pred_fallthru
      _
    // Predicated region
    $region10: #{tpu_custom_call.1} parent=1 // pred_check
      _
    $region11: #{tpu_custom_call.1} parent=1 // pred_check_branch
      %52 = sbr.rel (0) target = $region13
    $region12: #{tpu_custom_call.1} parent=1 // pred_region
      %s54 = ssub.s32 128, 128
      %55 = vsyncadd [#allocation6], %s54
      %s56 = sshll.u32 [#allocation7], 4
      %s57 = int_to_ptr.vmem [resolvable:$true] %s56
      %62 = dma.hbm_to_vmem [thread:$0]  %s2, 128, %s57, [#allocation6], 64, 64, 4
    $region13: #{tpu_custom_call.1} parent=1 // pred_fallthru
      _
    // Predicated region
    $region14: #{tpu_custom_call.1} parent=1 // pred_check
      _
    $region15: #{tpu_custom_call.1} parent=1 // pred_check_branch
      %64 = sbr.rel (0) target = $region17
    $region16: #{tpu_custom_call.1} parent=1 // pred_region
      _
    $region17: #{tpu_custom_call.1} parent=1 // pred_fallthru
      _
    // Predicated region
    $region18: #{tpu_custom_call.1} parent=1 // pred_check
      _
    $region19: #{tpu_custom_call.1} parent=1 // pred_check_branch
      %66 = sbr.rel (0) target = $region21
    $region20: #{tpu_custom_call.1} parent=1 // pred_region
      %s68 = ssub.s32 1024, 1024
      %69 = vsyncadd [#allocation9], %s68
      %s70 = sshll.u32 [#allocation8], 4
      %s71 = int_to_ptr.vmem [resolvable:$true] %s70
      %76 = dma.hbm_to_vmem [thread:$0]  %s4, 1024, %s71, [#allocation9], 64, 64, 4
    $region21: #{tpu_custom_call.1} parent=1 // pred_fallthru
      _
    // Predicated region
    $region22: #{tpu_custom_call.1} parent=1 // pred_check
      _
    $region23: #{tpu_custom_call.1} parent=1 // pred_check_branch
      %78 = sbr.rel (0) target = $region25
    $region24: #{tpu_custom_call.1} parent=1 // pred_region
      _
    $region25: #{tpu_custom_call.1} parent=1 // pred_fallthru
      _
    // Predicated region
    $region26: #{tpu_custom_call.1} parent=1 // pred_check
      _
    $region27: #{tpu_custom_call.1} parent=1 // pred_check_branch
      %80 = sbr.rel (0) target = $region29
    $region28: #{tpu_custom_call.1} parent=1 // pred_region
      %s82 = ssub.s32 2048, 2048
      %83 = vsyncadd [#allocation9], %s82
      %s84 = sshll.u32 [#allocation10], 4
      %s85 = int_to_ptr.vmem [resolvable:$true] %s84
      %90 = dma.hbm_to_vmem [thread:$0]  %s6, 2048, %s85, [#allocation9], 128, 128, 8
    $region29: #{tpu_custom_call.1} parent=1 // pred_fallthru
      _
    // Predicated region
    $region30: #{tpu_custom_call.1} parent=1 // pred_check
      _
    $region31: #{tpu_custom_call.1} parent=1 // pred_check_branch
      %92 = sbr.rel (0) target = $region33
    $region32: #{tpu_custom_call.1} parent=1 // pred_region
      _
    $region33: #{tpu_custom_call.1} parent=1 // pred_fallthru
      _
    // Predicated region
    $region34: #{tpu_custom_call.1} parent=1 // pred_check
      _
    $region35: #{tpu_custom_call.1} parent=1 // pred_check_branch
      %94 = sbr.rel (0) target = $region37
    $region36: #{tpu_custom_call.1} parent=1 // pred_region
      %s96 = ssub.s32 1024, 1024
      %97 = vsyncadd [#allocation12], %s96
      %s98 = sshll.u32 [#allocation11], 4
      %s99 = int_to_ptr.vmem [resolvable:$true] %s98
      %104 = dma.hbm_to_vmem [thread:$0]  %s8, 1024, %s99, [#allocation12], 64, 64, 4
    $region37: #{tpu_custom_call.1} parent=1 // pred_fallthru
      _
    // Predicated region
    $region38: #{tpu_custom_call.1} parent=1 // pred_check
      _
    $region39: #{tpu_custom_call.1} parent=1 // pred_check_branch
      %106 = sbr.rel (0) target = $region41
    $region40: #{tpu_custom_call.1} parent=1 // pred_region
      _
    $region41: #{tpu_custom_call.1} parent=1 // pred_fallthru
      _
    // Predicated region
    $region42: #{tpu_custom_call.1} parent=1 // pred_check
      _
    $region43: #{tpu_custom_call.1} parent=1 // pred_check_branch
      %108 = sbr.rel (0) target = $region45
    $region44: #{tpu_custom_call.1} parent=1 // pred_region
      %s110 = ssub.s32 1024, 1024
      %111 = vsyncadd [#allocation12], %s110
      %s112 = sshll.u32 [#allocation13], 4
      %s113 = int_to_ptr.vmem [resolvable:$true] %s112
      %118 = dma.hbm_to_vmem [thread:$0]  %s10, 1024, %s113, [#allocation12], 64, 64, 4
    $region45: #{tpu_custom_call.1} parent=1 // pred_fallthru
      _
    // Predicated region
    $region46: #{tpu_custom_call.1} parent=1 // pred_check
      _
    $region47: #{tpu_custom_call.1} parent=1 // pred_check_branch
      %120 = sbr.rel (0) target = $region49
    $region48: #{tpu_custom_call.1} parent=1 // pred_region
      _
    $region49: #{tpu_custom_call.1} parent=1 // pred_fallthru
      _
    // Predicated region
    $region50: #{tpu_custom_call.1} parent=1 // pred_check
      _
    $region51: #{tpu_custom_call.1} parent=1 // pred_check_branch
      %122 = sbr.rel (0) target = $region53
    $region52: #{tpu_custom_call.1} parent=1 // pred_region
      %s124 = ssub.s32 1024, 1024
      %125 = vsyncadd [#allocation15], %s124
      %s126 = sshll.u32 [#allocation14], 4
      %s127 = int_to_ptr.vmem [resolvable:$true] %s126
      %132 = dma.hbm_to_vmem [thread:$0]  %s12, 1024, %s127, [#allocation15], 64, 64, 4
    $region53: #{tpu_custom_call.1} parent=1 // pred_fallthru
      _
    // Predicated region
    $region54: #{tpu_custom_call.1} parent=1 // pred_check
      _
    $region55: #{tpu_custom_call.1} parent=1 // pred_check_branch
      %134 = sbr.rel (0) target = $region57
    $region56: #{tpu_custom_call.1} parent=1 // pred_region
      _
    $region57: #{tpu_custom_call.1} parent=1 // pred_fallthru
      _
    // Predicated region
    $region58: #{tpu_custom_call.1} parent=1 // pred_check
      _
    $region59: #{tpu_custom_call.1} parent=1 // pred_check_branch
      %136 = sbr.rel (0) target = $region61
    $region60: #{tpu_custom_call.1} parent=1 // pred_region
      %137 = dma.done [#allocation3], 64
    $region61: #{tpu_custom_call.1} parent=1 // pred_fallthru
      _
    // Predicated region
    $region62: #{tpu_custom_call.1} parent=1 // pred_check
      _
    $region63: #{tpu_custom_call.1} parent=1 // pred_check_branch
      %139 = sbr.rel (0) target = $region65
    $region64: #{tpu_custom_call.1} parent=1 // pred_region
      %140 = dma.done [#allocation6], 128
    $region65: #{tpu_custom_call.1} parent=1 // pred_fallthru
      _
    // Predicated region
    $region66: #{tpu_custom_call.1} parent=1 // pred_check
      _
    $region67: #{tpu_custom_call.1} parent=1 // pred_check_branch
      %142 = sbr.rel (0) target = $region69
    $region68: #{tpu_custom_call.1} parent=1 // pred_region
      %143 = dma.done [#allocation6], 128
    $region69: #{tpu_custom_call.1} parent=1 // pred_fallthru
      _
    // Predicated region
    $region70: #{tpu_custom_call.1} parent=1 // pred_check
      _
    $region71: #{tpu_custom_call.1} parent=1 // pred_check_branch
      %145 = sbr.rel (0) target = $region73
    $region72: #{tpu_custom_call.1} parent=1 // pred_region
      %146 = dma.done [#allocation9], 1024
    $region73: #{tpu_custom_call.1} parent=1 // pred_fallthru
      _
    // Predicated region
    $region74: #{tpu_custom_call.1} parent=1 // pred_check
      _
    $region75: #{tpu_custom_call.1} parent=1 // pred_check_branch
      %148 = sbr.rel (0) target = $region77
    $region76: #{tpu_custom_call.1} parent=1 // pred_region
      %149 = dma.done [#allocation9], 2048
    $region77: #{tpu_custom_call.1} parent=1 // pred_fallthru
      _
    // Predicated region
    $region78: #{tpu_custom_call.1} parent=1 // pred_check
      _
    $region79: #{tpu_custom_call.1} parent=1 // pred_check_branch
      %151 = sbr.rel (0) target = $region81
    $region80: #{tpu_custom_call.1} parent=1 // pred_region
      %152 = dma.done [#allocation12], 1024
    $region81: #{tpu_custom_call.1} parent=1 // pred_fallthru
      _
    // Predicated region
    $region82: #{tpu_custom_call.1} parent=1 // pred_check
      _
    $region83: #{tpu_custom_call.1} parent=1 // pred_check_branch
      %154 = sbr.rel (0) target = $region85
    $region84: #{tpu_custom_call.1} parent=1 // pred_region
      %155 = dma.done [#allocation12], 1024
    $region85: #{tpu_custom_call.1} parent=1 // pred_fallthru
      _
    // Predicated region
    $region86: #{tpu_custom_call.1} parent=1 // pred_check
      _
    $region87: #{tpu_custom_call.1} parent=1 // pred_check_branch
      %157 = sbr.rel (0) target = $region89
    $region88: #{tpu_custom_call.1} parent=1 // pred_region
      %158 = dma.done [#allocation15], 1024
    $region89: #{tpu_custom_call.1} parent=1 // pred_fallthru
      _
    %v160 = vld [vmem:[#allocation2] sm:$0xf]
    %v161 = vld [vmem:[#allocation7] sm:$0xf]
    %v162 = vld [vmem:[#allocation7 + $0x4] sm:$0xf]
    %v163 = vld [vmem:[%s3] sm:$0x1]
    %v165 = vlaneseq
    %v166 = vshrl.u32 %v165, 7
    %v167 = vsub.s32 0, %v166
    %v168 = vrot.slane %v163, %v167
    %v172 = vunpack.c.l.b16 %v161
    %v173 = vunpack.c.l.b16 %v162
    %v174 = vpack.c.b16 %v173, %v172
    %vm176 = vcmask 130048
    %v178 = vsel %vm176, %v160, 0
    %180 = vmatprep.subr.bf16.mxu0 0
    %181 = vmatpush1.bf16.msra.mxu0 %v174
    %182 = vmatprep.subr.bf16.mxu0 0
    %183 = vmatpush1.bf16.msra.mxu0 0
    %184 = vmatprep.subr.bf16.mxu0 0
    %185 = vmatpush1.bf16.msra.mxu0 0
    %186 = vmatprep.subr.bf16.mxu0 0
    %187 = vmatpush1.bf16.msra.mxu0 0
    %188 = vmatprep.subr.bf16.mxu0 0
    %189 = vmatpush1.bf16.msra.mxu0 0
    %190 = vmatprep.subr.bf16.mxu0 0
    %191 = vmatpush1.bf16.msra.mxu0 0
    %192 = vmatprep.subr.bf16.mxu0 0
    %193 = vmatpush1.bf16.msra.mxu0 0
    %194 = vmatprep.subr.bf16.mxu0 0
    %195 = vmatpush1.bf16.msra.mxu0 0
    %196 = vmatprep.subr.bf16.mxu0 0
    %197 = vmatpush1.bf16.msra.mxu0 0
    %198 = vmatprep.subr.bf16.mxu0 0
    %199 = vmatpush1.bf16.msra.mxu0 0
    %200 = vmatprep.subr.bf16.mxu0 0
    %201 = vmatpush1.bf16.msra.mxu0 0
    %202 = vmatprep.subr.bf16.mxu0 0
    %203 = vmatpush1.bf16.msra.mxu0 0
    %204 = vmatprep.subr.bf16.mxu0 0
    %205 = vmatpush1.bf16.msra.mxu0 0
    %206 = vmatprep.subr.bf16.mxu0 0
    %207 = vmatpush1.bf16.msra.mxu0 0
    %208 = vmatprep.subr.bf16.mxu0 0
    %209 = vmatpush1.bf16.msra.mxu0 0
    %210 = vmatprep.subr.bf16.mxu0 0
    %211 = vmatpush1.bf16.msra.mxu0 0
    %212 = vmatprep.mubr.bf16.mxu0 0
    %213 = vmatmul.mubr.bf16.gmra.mrb[0].mxu0 %v178
    %v214 = vpop.f32.mrb[0].mxu0
    %v215 = vadd.f32 %v168, %v214
    %v216 = vpop.f32.mrb[0].mxu0
    %v217 = vpop.f32.mrb[0].mxu0
    %v218 = vpop.f32.mrb[0].mxu0
    %219 = vdwg.mxu0
    %v220 = vmax.f32 %v215, 0.0
    %v221 = vpack.c.bf16 %v220, %v220
    %v222 = vld [vmem:[#allocation8] sm:$0xf]
    %v223 = vld [vmem:[#allocation8 + $0x4] sm:$0xf]
    %v224 = vld [vmem:[#allocation8 + $0x8] sm:$0xf]
    %v225 = vld [vmem:[#allocation8 + $0xc] sm:$0xf]
    %v226 = vld [vmem:[#allocation8 + $0x10] sm:$0xf]
    %v227 = vld [vmem:[#allocation8 + $0x14] sm:$0xf]
    %v228 = vld [vmem:[#allocation8 + $0x18] sm:$0xf]
    %v229 = vld [vmem:[#allocation8 + $0x1c] sm:$0xf]
    %v230 = vld [vmem:[#allocation8 + $0x20] sm:$0xf]
    %v231 = vld [vmem:[#allocation8 + $0x24] sm:$0xf]
    %v232 = vld [vmem:[#allocation8 + $0x28] sm:$0xf]
    %v233 = vld [vmem:[#allocation8 + $0x2c] sm:$0xf]
    %v234 = vld [vmem:[#allocation8 + $0x30] sm:$0xf]
    %v235 = vld [vmem:[#allocation8 + $0x34] sm:$0xf]
    %v236 = vld [vmem:[#allocation8 + $0x38] sm:$0xf]
    %v237 = vld [vmem:[#allocation8 + $0x3c] sm:$0xf]
    %v238 = vld [vmem:[%s5] sm:$0x1]
    %v240 = vlaneseq
    %v241 = vshrl.u32 %v240, 7
    %v242 = vsub.s32 0, %v241
    %v243 = vrot.slane %v238, %v242
    %v261 = vunpack.c.l.b16 %v222
    %v262 = vunpack.c.l.b16 %v223
    %v263 = vunpack.c.l.b16 %v224
    %v264 = vunpack.c.l.b16 %v225
    %v265 = vunpack.c.l.b16 %v226
    %v266 = vunpack.c.l.b16 %v227
    %v267 = vunpack.c.l.b16 %v228
    %v268 = vunpack.c.l.b16 %v229
    %v269 = vunpack.c.l.b16 %v230
    %v270 = vunpack.c.l.b16 %v231
    %v271 = vunpack.c.l.b16 %v232
    %v272 = vunpack.c.l.b16 %v233
    %v273 = vunpack.c.l.b16 %v234
    %v274 = vunpack.c.l.b16 %v235
    %v275 = vunpack.c.l.b16 %v236
    %v276 = vunpack.c.l.b16 %v237
    %v277 = vpack.c.b16 %v262, %v261
    %v278 = vpack.c.b16 %v264, %v263
    %v279 = vpack.c.b16 %v266, %v265
    %v280 = vpack.c.b16 %v268, %v267
    %v281 = vpack.c.b16 %v270, %v269
    %v282 = vpack.c.b16 %v272, %v271
    %v283 = vpack.c.b16 %v274, %v273
    %v284 = vpack.c.b16 %v276, %v275
    %293 = vmatprep.subr.bf16.mxu0 0
    %294 = vmatpush1.bf16.msra.mxu0 %v277
    %295 = vmatprep.subr.bf16.mxu0 0
    %296 = vmatpush1.bf16.msra.mxu0 %v278
    %297 = vmatprep.subr.bf16.mxu0 0
    %298 = vmatpush1.bf16.msra.mxu0 %v279
    %299 = vmatprep.subr.bf16.mxu0 0
    %300 = vmatpush1.bf16.msra.mxu0 %v280
    %301 = vmatprep.subr.bf16.mxu0 0
    %302 = vmatpush1.bf16.msra.mxu0 %v281
    %303 = vmatprep.subr.bf16.mxu0 0
    %304 = vmatpush1.bf16.msra.mxu0 %v282
    %305 = vmatprep.subr.bf16.mxu0 0
    %306 = vmatpush1.bf16.msra.mxu0 %v283
    %307 = vmatprep.subr.bf16.mxu0 0
    %308 = vmatpush1.bf16.msra.mxu0 %v284
    %309 = vmatprep.subr.bf16.mxu0 0
    %310 = vmatpush1.bf16.msra.mxu0 0
    %311 = vmatprep.subr.bf16.mxu0 0
    %312 = vmatpush1.bf16.msra.mxu0 0
    %313 = vmatprep.subr.bf16.mxu0 0
    %314 = vmatpush1.bf16.msra.mxu0 0
    %315 = vmatprep.subr.bf16.mxu0 0
    %316 = vmatpush1.bf16.msra.mxu0 0
    %317 = vmatprep.subr.bf16.mxu0 0
    %318 = vmatpush1.bf16.msra.mxu0 0
    %319 = vmatprep.subr.bf16.mxu0 0
    %320 = vmatpush1.bf16.msra.mxu0 0
    %321 = vmatprep.subr.bf16.mxu0 0
    %322 = vmatpush1.bf16.msra.mxu0 0
    %323 = vmatprep.subr.bf16.mxu0 0
    %324 = vmatpush1.bf16.msra.mxu0 0
    %325 = vmatprep.mubr.bf16.mxu0 0
    %326 = vmatmul.mubr.bf16.gmra.mrb[0].mxu0 %v221
    %v327 = vpop.f32.mrb[0].mxu0
    %v328 = vadd.f32 %v243, %v327
    %v329 = vpop.f32.mrb[0].mxu0
    %v330 = vpop.f32.mrb[0].mxu0
    %v331 = vpop.f32.mrb[0].mxu0
    %332 = vdwg.mxu0
    %v333 = vmax.f32 %v328, 0.0
    %v334 = vpack.c.bf16 %v333, %v333
    %v335 = vld [vmem:[#allocation10] sm:$0xff]
    %v336 = vld [vmem:[#allocation10 + $0x8] sm:$0xff]
    %v337 = vld [vmem:[#allocation10 + $0x10] sm:$0xff]
    %v338 = vld [vmem:[#allocation10 + $0x18] sm:$0xff]
    %v339 = vld [vmem:[#allocation10 + $0x20] sm:$0xff]
    %v340 = vld [vmem:[#allocation10 + $0x28] sm:$0xff]
    %v341 = vld [vmem:[#allocation10 + $0x30] sm:$0xff]
    %v342 = vld [vmem:[#allocation10 + $0x38] sm:$0xff]
    %v343 = vld [vmem:[#allocation10 + $0x40] sm:$0xff]
    %v344 = vld [vmem:[#allocation10 + $0x48] sm:$0xff]
    %v345 = vld [vmem:[#allocation10 + $0x50] sm:$0xff]
    %v346 = vld [vmem:[#allocation10 + $0x58] sm:$0xff]
    %v347 = vld [vmem:[#allocation10 + $0x60] sm:$0xff]
    %v348 = vld [vmem:[#allocation10 + $0x68] sm:$0xff]
    %v349 = vld [vmem:[#allocation10 + $0x70] sm:$0xff]
    %v350 = vld [vmem:[#allocation10 + $0x78] sm:$0xff]
    %v351 = vld [vmem:[%s7] sm:$0x3]
    %v353 = vlaneseq
    %v354 = vshrl.u32 %v353, 7
    %v355 = vsub.s32 0, %v354
    %v356 = vrot.slane %v351, %v355
    %v357 = vlaneseq
    %v358 = vshrl.u32 %v357, 7
    %v359 = vsub.s32 1, %v358
    %v360 = vrot.slane %v351, %v359
    %v379 = vunpack.c.l.b16 %v335
    %v380 = vunpack.c.h.b16 %v335
    %v381 = vunpack.c.l.b16 %v336
    %v382 = vunpack.c.h.b16 %v336
    %v383 = vunpack.c.l.b16 %v337
    %v384 = vunpack.c.h.b16 %v337
    %v385 = vunpack.c.l.b16 %v338
    %v386 = vunpack.c.h.b16 %v338
    %v387 = vunpack.c.l.b16 %v339
    %v388 = vunpack.c.h.b16 %v339
    %v389 = vunpack.c.l.b16 %v340
    %v390 = vunpack.c.h.b16 %v340
    %v391 = vunpack.c.l.b16 %v341
    %v392 = vunpack.c.h.b16 %v341
    %v393 = vunpack.c.l.b16 %v342
    %v394 = vunpack.c.h.b16 %v342
    %v395 = vunpack.c.l.b16 %v343
    %v396 = vunpack.c.h.b16 %v343
    %v397 = vunpack.c.l.b16 %v344
    %v398 = vunpack.c.h.b16 %v344
    %v399 = vunpack.c.l.b16 %v345
    %v400 = vunpack.c.h.b16 %v345
    %v401 = vunpack.c.l.b16 %v346
    %v402 = vunpack.c.h.b16 %v346
    %v403 = vunpack.c.l.b16 %v347
    %v404 = vunpack.c.h.b16 %v347
    %v405 = vunpack.c.l.b16 %v348
    %v406 = vunpack.c.h.b16 %v348
    %v407 = vunpack.c.l.b16 %v349
    %v408 = vunpack.c.h.b16 %v349
    %v409 = vunpack.c.l.b16 %v350
    %v410 = vunpack.c.h.b16 %v350
    %v411 = vpack.c.b16 %v381, %v379
    %v412 = vpack.c.b16 %v382, %v380
    %v413 = vpack.c.b16 %v385, %v383
    %v414 = vpack.c.b16 %v386, %v384
    %v415 = vpack.c.b16 %v389, %v387
    %v416 = vpack.c.b16 %v390, %v388
    %v417 = vpack.c.b16 %v393, %v391
    %v418 = vpack.c.b16 %v394, %v392
    %v419 = vpack.c.b16 %v397, %v395
    %v420 = vpack.c.b16 %v398, %v396
    %v421 = vpack.c.b16 %v401, %v399
    %v422 = vpack.c.b16 %v402, %v400
    %v423 = vpack.c.b16 %v405, %v403
    %v424 = vpack.c.b16 %v406, %v404
    %v425 = vpack.c.b16 %v409, %v407
    %v426 = vpack.c.b16 %v410, %v408
    %443 = vmatprep.subr.bf16.mxu0 %v412
    %444 = vmatpush1.bf16.msra.mxu0 %v411
    %445 = vmatprep.subr.bf16.mxu0 %v414
    %446 = vmatpush1.bf16.msra.mxu0 %v413
    %447 = vmatprep.subr.bf16.mxu0 %v416
    %448 = vmatpush1.bf16.msra.mxu0 %v415
    %449 = vmatprep.subr.bf16.mxu0 %v418
    %450 = vmatpush1.bf16.msra.mxu0 %v417
    %451 = vmatprep.subr.bf16.mxu0 %v420
    %452 = vmatpush1.bf16.msra.mxu0 %v419
    %453 = vmatprep.subr.bf16.mxu0 %v422
    %454 = vmatpush1.bf16.msra.mxu0 %v421
    %455 = vmatprep.subr.bf16.mxu0 %v424
    %456 = vmatpush1.bf16.msra.mxu0 %v423
    %457 = vmatprep.subr.bf16.mxu0 %v426
    %458 = vmatpush1.bf16.msra.mxu0 %v425
    %459 = vmatprep.subr.bf16.mxu0 0
    %460 = vmatpush1.bf16.msra.mxu0 0
    %461 = vmatprep.subr.bf16.mxu0 0
    %462 = vmatpush1.bf16.msra.mxu0 0
    %463 = vmatprep.subr.bf16.mxu0 0
    %464 = vmatpush1.bf16.msra.mxu0 0
    %465 = vmatprep.subr.bf16.mxu0 0
    %466 = vmatpush1.bf16.msra.mxu0 0
    %467 = vmatprep.subr.bf16.mxu0 0
    %468 = vmatpush1.bf16.msra.mxu0 0
    %469 = vmatprep.subr.bf16.mxu0 0
    %470 = vmatpush1.bf16.msra.mxu0 0
    %471 = vmatprep.subr.bf16.mxu0 0
    %472 = vmatpush1.bf16.msra.mxu0 0
    %473 = vmatprep.subr.bf16.mxu0 0
    %474 = vmatpush1.bf16.msra.mxu0 0
    %475 = vmatprep.mubr.bf16.mxu0 0
    %476 = vmatmul.mubr.bf16.gmra.mrb[0].mxu0 %v334
    %v477 = vpop.f32.mrb[0].mxu0
    %v478 = vadd.f32 %v356, %v477
    %v479 = vpop.f32.mrb[0].mxu0
    %v480 = vadd.f32 %v360, %v479
    %v481 = vpop.f32.mrb[0].mxu0
    %v482 = vpop.f32.mrb[0].mxu0
    %483 = vdwg.mxu0
    %484 = vst [vmem:[#allocation17] sm:$0xff] %v478
    %485 = vst [vmem:[#allocation19] sm:$0xff] %v480
    %v486 = vld [vmem:[#allocation5] sm:$0xff]
    %v487 = vmul.f32 %v480, 0.5
    %v488 = vmul.f32 %v487, 1.442695
    %v489 = vpow.pop %v488
    %v490 = vmul.f32 %v486, %v489
    %v491 = vadd.f32 %v478, %v490
    %492 = vst [vmem:[#allocation20] sm:$0xff] %v491
    %v493 = vpack.c.bf16 %v491, %v491
    %v494 = vld [vmem:[#allocation11] sm:$0xf]
    %v495 = vld [vmem:[#allocation11 + $0x4] sm:$0xf]
    %v496 = vld [vmem:[#allocation11 + $0x8] sm:$0xf]
    %v497 = vld [vmem:[#allocation11 + $0xc] sm:$0xf]
    %v498 = vld [vmem:[#allocation11 + $0x10] sm:$0xf]
    %v499 = vld [vmem:[#allocation11 + $0x14] sm:$0xf]
    %v500 = vld [vmem:[#allocation11 + $0x18] sm:$0xf]
    %v501 = vld [vmem:[#allocation11 + $0x1c] sm:$0xf]
    %v502 = vld [vmem:[#allocation11 + $0x20] sm:$0xf]
    %v503 = vld [vmem:[#allocation11 + $0x24] sm:$0xf]
    %v504 = vld [vmem:[#allocation11 + $0x28] sm:$0xf]
    %v505 = vld [vmem:[#allocation11 + $0x2c] sm:$0xf]
    %v506 = vld [vmem:[#allocation11 + $0x30] sm:$0xf]
    %v507 = vld [vmem:[#allocation11 + $0x34] sm:$0xf]
    %v508 = vld [vmem:[#allocation11 + $0x38] sm:$0xf]
    %v509 = vld [vmem:[#allocation11 + $0x3c] sm:$0xf]
    %v510 = vld [vmem:[%s9] sm:$0x1]
    %v512 = vlaneseq
    %v513 = vshrl.u32 %v512, 7
    %v514 = vsub.s32 0, %v513
    %v515 = vrot.slane %v510, %v514
    %v533 = vunpack.c.l.b16 %v494
    %v534 = vunpack.c.l.b16 %v495
    %v535 = vunpack.c.l.b16 %v496
    %v536 = vunpack.c.l.b16 %v497
    %v537 = vunpack.c.l.b16 %v498
    %v538 = vunpack.c.l.b16 %v499
    %v539 = vunpack.c.l.b16 %v500
    %v540 = vunpack.c.l.b16 %v501
    %v541 = vunpack.c.l.b16 %v502
    %v542 = vunpack.c.l.b16 %v503
    %v543 = vunpack.c.l.b16 %v504
    %v544 = vunpack.c.l.b16 %v505
    %v545 = vunpack.c.l.b16 %v506
    %v546 = vunpack.c.l.b16 %v507
    %v547 = vunpack.c.l.b16 %v508
    %v548 = vunpack.c.l.b16 %v509
    %v549 = vpack.c.b16 %v534, %v533
    %v550 = vpack.c.b16 %v536, %v535
    %v551 = vpack.c.b16 %v538, %v537
    %v552 = vpack.c.b16 %v540, %v539
    %v553 = vpack.c.b16 %v542, %v541
    %v554 = vpack.c.b16 %v544, %v543
    %v555 = vpack.c.b16 %v546, %v545
    %v556 = vpack.c.b16 %v548, %v547
    %565 = vmatprep.subr.bf16.mxu0 0
    %566 = vmatpush1.bf16.msra.mxu0 %v549
    %567 = vmatprep.subr.bf16.mxu0 0
    %568 = vmatpush1.bf16.msra.mxu0 %v550
    %569 = vmatprep.subr.bf16.mxu0 0
    %570 = vmatpush1.bf16.msra.mxu0 %v551
    %571 = vmatprep.subr.bf16.mxu0 0
    %572 = vmatpush1.bf16.msra.mxu0 %v552
    %573 = vmatprep.subr.bf16.mxu0 0
    %574 = vmatpush1.bf16.msra.mxu0 %v553
    %575 = vmatprep.subr.bf16.mxu0 0
    %576 = vmatpush1.bf16.msra.mxu0 %v554
    %577 = vmatprep.subr.bf16.mxu0 0
    %578 = vmatpush1.bf16.msra.mxu0 %v555
    %579 = vmatprep.subr.bf16.mxu0 0
    %580 = vmatpush1.bf16.msra.mxu0 %v556
    %581 = vmatprep.subr.bf16.mxu0 0
    %582 = vmatpush1.bf16.msra.mxu0 0
    %583 = vmatprep.subr.bf16.mxu0 0
    %584 = vmatpush1.bf16.msra.mxu0 0
    %585 = vmatprep.subr.bf16.mxu0 0
    %586 = vmatpush1.bf16.msra.mxu0 0
    %587 = vmatprep.subr.bf16.mxu0 0
    %588 = vmatpush1.bf16.msra.mxu0 0
    %589 = vmatprep.subr.bf16.mxu0 0
    %590 = vmatpush1.bf16.msra.mxu0 0
    %591 = vmatprep.subr.bf16.mxu0 0
    %592 = vmatpush1.bf16.msra.mxu0 0
    %593 = vmatprep.subr.bf16.mxu0 0
    %594 = vmatpush1.bf16.msra.mxu0 0
    %595 = vmatprep.subr.bf16.mxu0 0
    %596 = vmatpush1.bf16.msra.mxu0 0
    %597 = vmatprep.mubr.bf16.mxu0 0
    %598 = vmatmul.mubr.bf16.gmra.mrb[0].mxu0 %v493
    %v599 = vpop.f32.mrb[0].mxu0
    %v600 = vadd.f32 %v515, %v599
    %v601 = vpop.f32.mrb[0].mxu0
    %v602 = vpop.f32.mrb[0].mxu0
    %v603 = vpop.f32.mrb[0].mxu0
    %604 = vdwg.mxu0
    %v605 = vmax.f32 %v600, 0.0
    %v606 = vpack.c.bf16 %v605, %v605
    %v607 = vld [vmem:[#allocation13] sm:$0xf]
    %v608 = vld [vmem:[#allocation13 + $0x4] sm:$0xf]
    %v609 = vld [vmem:[#allocation13 + $0x8] sm:$0xf]
    %v610 = vld [vmem:[#allocation13 + $0xc] sm:$0xf]
    %v611 = vld [vmem:[#allocation13 + $0x10] sm:$0xf]
    %v612 = vld [vmem:[#allocation13 + $0x14] sm:$0xf]
    %v613 = vld [vmem:[#allocation13 + $0x18] sm:$0xf]
    %v614 = vld [vmem:[#allocation13 + $0x1c] sm:$0xf]
    %v615 = vld [vmem:[#allocation13 + $0x20] sm:$0xf]
    %v616 = vld [vmem:[#allocation13 + $0x24] sm:$0xf]
    %v617 = vld [vmem:[#allocation13 + $0x28] sm:$0xf]
    %v618 = vld [vmem:[#allocation13 + $0x2c] sm:$0xf]
    %v619 = vld [vmem:[#allocation13 + $0x30] sm:$0xf]
    %v620 = vld [vmem:[#allocation13 + $0x34] sm:$0xf]
    %v621 = vld [vmem:[#allocation13 + $0x38] sm:$0xf]
    %v622 = vld [vmem:[#allocation13 + $0x3c] sm:$0xf]
    %v623 = vld [vmem:[%s11] sm:$0x1]
    %v625 = vlaneseq
    %v626 = vshrl.u32 %v625, 7
    %v627 = vsub.s32 0, %v626
    %v628 = vrot.slane %v623, %v627
    %v646 = vunpack.c.l.b16 %v607
    %v647 = vunpack.c.l.b16 %v608
    %v648 = vunpack.c.l.b16 %v609
    %v649 = vunpack.c.l.b16 %v610
    %v650 = vunpack.c.l.b16 %v611
    %v651 = vunpack.c.l.b16 %v612
    %v652 = vunpack.c.l.b16 %v613
    %v653 = vunpack.c.l.b16 %v614
    %v654 = vunpack.c.l.b16 %v615
    %v655 = vunpack.c.l.b16 %v616
    %v656 = vunpack.c.l.b16 %v617
    %v657 = vunpack.c.l.b16 %v618
    %v658 = vunpack.c.l.b16 %v619
    %v659 = vunpack.c.l.b16 %v620
    %v660 = vunpack.c.l.b16 %v621
    %v661 = vunpack.c.l.b16 %v622
    %v662 = vpack.c.b16 %v647, %v646
    %v663 = vpack.c.b16 %v649, %v648
    %v664 = vpack.c.b16 %v651, %v650
    %v665 = vpack.c.b16 %v653, %v652
    %v666 = vpack.c.b16 %v655, %v654
    %v667 = vpack.c.b16 %v657, %v656
    %v668 = vpack.c.b16 %v659, %v658
    %v669 = vpack.c.b16 %v661, %v660
    %678 = vmatprep.subr.bf16.mxu0 0
    %679 = vmatpush1.bf16.msra.mxu0 %v662
    %680 = vmatprep.subr.bf16.mxu0 0
    %681 = vmatpush1.bf16.msra.mxu0 %v663
    %682 = vmatprep.subr.bf16.mxu0 0
    %683 = vmatpush1.bf16.msra.mxu0 %v664
    %684 = vmatprep.subr.bf16.mxu0 0
    %685 = vmatpush1.bf16.msra.mxu0 %v665
    %686 = vmatprep.subr.bf16.mxu0 0
    %687 = vmatpush1.bf16.msra.mxu0 %v666
    %688 = vmatprep.subr.bf16.mxu0 0
    %689 = vmatpush1.bf16.msra.mxu0 %v667
    %690 = vmatprep.subr.bf16.mxu0 0
    %691 = vmatpush1.bf16.msra.mxu0 %v668
    %692 = vmatprep.subr.bf16.mxu0 0
    %693 = vmatpush1.bf16.msra.mxu0 %v669
    %694 = vmatprep.subr.bf16.mxu0 0
    %695 = vmatpush1.bf16.msra.mxu0 0
    %696 = vmatprep.subr.bf16.mxu0 0
    %697 = vmatpush1.bf16.msra.mxu0 0
    %698 = vmatprep.subr.bf16.mxu0 0
    %699 = vmatpush1.bf16.msra.mxu0 0
    %700 = vmatprep.subr.bf16.mxu0 0
    %701 = vmatpush1.bf16.msra.mxu0 0
    %702 = vmatprep.subr.bf16.mxu0 0
    %703 = vmatpush1.bf16.msra.mxu0 0
    %704 = vmatprep.subr.bf16.mxu0 0
    %705 = vmatpush1.bf16.msra.mxu0 0
    %706 = vmatprep.subr.bf16.mxu0 0
    %707 = vmatpush1.bf16.msra.mxu0 0
    %708 = vmatprep.subr.bf16.mxu0 0
    %709 = vmatpush1.bf16.msra.mxu0 0
    %710 = vmatprep.mubr.bf16.mxu0 0
    %711 = vmatmul.mubr.bf16.gmra.mrb[0].mxu0 %v606
    %v712 = vpop.f32.mrb[0].mxu0
    %v713 = vadd.f32 %v628, %v712
    %v714 = vpop.f32.mrb[0].mxu0
    %v715 = vpop.f32.mrb[0].mxu0
    %v716 = vpop.f32.mrb[0].mxu0
    %717 = vdwg.mxu0
    %v718 = vmax.f32 %v713, 0.0
    %v719 = vpack.c.bf16 %v718, %v718
    %v720 = vld [vmem:[#allocation14] sm:$0xf]
    %v721 = vld [vmem:[#allocation14 + $0x4] sm:$0xf]
    %v722 = vld [vmem:[#allocation14 + $0x8] sm:$0xf]
    %v723 = vld [vmem:[#allocation14 + $0xc] sm:$0xf]
    %v724 = vld [vmem:[#allocation14 + $0x10] sm:$0xf]
    %v725 = vld [vmem:[#allocation14 + $0x14] sm:$0xf]
    %v726 = vld [vmem:[#allocation14 + $0x18] sm:$0xf]
    %v727 = vld [vmem:[#allocation14 + $0x1c] sm:$0xf]
    %v728 = vld [vmem:[#allocation14 + $0x20] sm:$0xf]
    %v729 = vld [vmem:[#allocation14 + $0x24] sm:$0xf]
    %v730 = vld [vmem:[#allocation14 + $0x28] sm:$0xf]
    %v731 = vld [vmem:[#allocation14 + $0x2c] sm:$0xf]
    %v732 = vld [vmem:[#allocation14 + $0x30] sm:$0xf]
    %v733 = vld [vmem:[#allocation14 + $0x34] sm:$0xf]
    %v734 = vld [vmem:[#allocation14 + $0x38] sm:$0xf]
    %v735 = vld [vmem:[#allocation14 + $0x3c] sm:$0xf]
    %v736 = vld [vmem:[%s13] sm:$0x1]
    %v738 = vlaneseq
    %v739 = vshrl.u32 %v738, 7
    %v740 = vsub.s32 0, %v739
    %v741 = vrot.slane %v736, %v740
    %v759 = vunpack.c.l.b16 %v720
    %v760 = vunpack.c.l.b16 %v721
    %v761 = vunpack.c.l.b16 %v722
    %v762 = vunpack.c.l.b16 %v723
    %v763 = vunpack.c.l.b16 %v724
    %v764 = vunpack.c.l.b16 %v725
    %v765 = vunpack.c.l.b16 %v726
    %v766 = vunpack.c.l.b16 %v727
    %v767 = vunpack.c.l.b16 %v728
    %v768 = vunpack.c.l.b16 %v729
    %v769 = vunpack.c.l.b16 %v730
    %v770 = vunpack.c.l.b16 %v731
    %v771 = vunpack.c.l.b16 %v732
    %v772 = vunpack.c.l.b16 %v733
    %v773 = vunpack.c.l.b16 %v734
    %v774 = vunpack.c.l.b16 %v735
    %v775 = vpack.c.b16 %v760, %v759
    %v776 = vpack.c.b16 %v762, %v761
    %v777 = vpack.c.b16 %v764, %v763
    %v778 = vpack.c.b16 %v766, %v765
    %v779 = vpack.c.b16 %v768, %v767
    %v780 = vpack.c.b16 %v770, %v769
    %v781 = vpack.c.b16 %v772, %v771
    %v782 = vpack.c.b16 %v774, %v773
    %791 = vmatprep.subr.bf16.mxu0 0
    %792 = vmatpush1.bf16.msra.mxu0 %v775
    %793 = vmatprep.subr.bf16.mxu0 0
    %794 = vmatpush1.bf16.msra.mxu0 %v776
    %795 = vmatprep.subr.bf16.mxu0 0
    %796 = vmatpush1.bf16.msra.mxu0 %v777
    %797 = vmatprep.subr.bf16.mxu0 0
    %798 = vmatpush1.bf16.msra.mxu0 %v778
    %799 = vmatprep.subr.bf16.mxu0 0
    %800 = vmatpush1.bf16.msra.mxu0 %v779
    %801 = vmatprep.subr.bf16.mxu0 0
    %802 = vmatpush1.bf16.msra.mxu0 %v780
    %803 = vmatprep.subr.bf16.mxu0 0
    %804 = vmatpush1.bf16.msra.mxu0 %v781
    %805 = vmatprep.subr.bf16.mxu0 0
    %806 = vmatpush1.bf16.msra.mxu0 %v782
    %807 = vmatprep.subr.bf16.mxu0 0
    %808 = vmatpush1.bf16.msra.mxu0 0
    %809 = vmatprep.subr.bf16.mxu0 0
    %810 = vmatpush1.bf16.msra.mxu0 0
    %811 = vmatprep.subr.bf16.mxu0 0
    %812 = vmatpush1.bf16.msra.mxu0 0
    %813 = vmatprep.subr.bf16.mxu0 0
    %814 = vmatpush1.bf16.msra.mxu0 0
    %815 = vmatprep.subr.bf16.mxu0 0
    %816 = vmatpush1.bf16.msra.mxu0 0
    %817 = vmatprep.subr.bf16.mxu0 0
    %818 = vmatpush1.bf16.msra.mxu0 0
    %819 = vmatprep.subr.bf16.mxu0 0
    %820 = vmatpush1.bf16.msra.mxu0 0
    %821 = vmatprep.subr.bf16.mxu0 0
    %822 = vmatpush1.bf16.msra.mxu0 0
    %823 = vmatprep.mubr.bf16.mxu0 0
    %824 = vmatmul.mubr.bf16.gmra.mrb[0].mxu0 %v719
    %v825 = vpop.f32.mrb[0].mxu0
    %v826 = vadd.f32 %v741, %v825
    %v827 = vpop.f32.mrb[0].mxu0
    %v828 = vpop.f32.mrb[0].mxu0
    %v829 = vpop.f32.mrb[0].mxu0
    %830 = vdwg.mxu0
    %831 = vst [vmem:[#allocation16] sm:$0xff] %v826
    // Predicated region
    $region90: #{tpu_custom_call.1} parent=1 // pred_check
      _
    $region91: #{tpu_custom_call.1} parent=1 // pred_check_branch
      %833 = sbr.rel (0) target = $region93
    $region92: #{tpu_custom_call.1} parent=1 // pred_region
      %s835 = ssub.s32 128, 128
      %836 = vsyncadd [#allocation4], %s835
      %s838 = sshll.u32 [#allocation16], 4
      %s839 = int_to_ptr.vmem [resolvable:$true] %s838
      %841 = dma.vmem_to_hbm [thread:$0]  %s839, 128, %s14, [#allocation4]
    $region93: #{tpu_custom_call.1} parent=1 // pred_fallthru
      _
    // Predicated region
    $region94: #{tpu_custom_call.1} parent=1 // pred_check
      _
    $region95: #{tpu_custom_call.1} parent=1 // pred_check_branch
      %843 = sbr.rel (0) target = $region97
    $region96: #{tpu_custom_call.1} parent=1 // pred_region
      %s845 = ssub.s32 128, 128
      %846 = vsyncadd [#allocation18], %s845
      %s848 = sshll.u32 [#allocation17], 4
      %s849 = int_to_ptr.vmem [resolvable:$true] %s848
      %851 = dma.vmem_to_hbm [thread:$0]  %s849, 128, %s15, [#allocation18]
    $region97: #{tpu_custom_call.1} parent=1 // pred_fallthru
      _
    // Predicated region
    $region98: #{tpu_custom_call.1} parent=1 // pred_check
      _
    $region99: #{tpu_custom_call.1} parent=1 // pred_check_branch
      %853 = sbr.rel (0) target = $region101
    $region100: #{tpu_custom_call.1} parent=1 // pred_region
      %s855 = ssub.s32 128, 128
      %856 = vsyncadd [#allocation18], %s855
      %s858 = sshll.u32 [#allocation19], 4
      %s859 = int_to_ptr.vmem [resolvable:$true] %s858
      %861 = dma.vmem_to_hbm [thread:$0]  %s859, 128, %s16, [#allocation18]
    $region101: #{tpu_custom_call.1} parent=1 // pred_fallthru
      _
    // Predicated region
    $region102: #{tpu_custom_call.1} parent=1 // pred_check
      _
    $region103: #{tpu_custom_call.1} parent=1 // pred_check_branch
      %863 = sbr.rel (0) target = $region105
    $region104: #{tpu_custom_call.1} parent=1 // pred_region
      %s865 = ssub.s32 128, 128
      %866 = vsyncadd [#allocation21], %s865
      %s868 = sshll.u32 [#allocation20], 4
      %s869 = int_to_ptr.vmem [resolvable:$true] %s868
      %871 = dma.vmem_to_hbm [thread:$0]  %s869, 128, %s17, [#allocation21]
    $region105: #{tpu_custom_call.1} parent=1 // pred_fallthru
      _
    // Predicated region
    $region106: #{tpu_custom_call.1} parent=1 // pred_check
      _
    $region107: #{tpu_custom_call.1} parent=1 // pred_check_branch
      %873 = sbr.rel (0) target = $region109
    $region108: #{tpu_custom_call.1} parent=1 // pred_region
      %874 = dma.done [#allocation4], 128
    $region109: #{tpu_custom_call.1} parent=1 // pred_fallthru
      _
    // Predicated region
    $region110: #{tpu_custom_call.1} parent=1 // pred_check
      _
    $region111: #{tpu_custom_call.1} parent=1 // pred_check_branch
      %876 = sbr.rel (0) target = $region113
    $region112: #{tpu_custom_call.1} parent=1 // pred_region
      %877 = dma.done [#allocation18], 128
    $region113: #{tpu_custom_call.1} parent=1 // pred_fallthru
      _
    // Predicated region
    $region114: #{tpu_custom_call.1} parent=1 // pred_check
      _
    $region115: #{tpu_custom_call.1} parent=1 // pred_check_branch
      %879 = sbr.rel (0) target = $region117
    $region116: #{tpu_custom_call.1} parent=1 // pred_region
      %880 = dma.done [#allocation18], 128
    $region117: #{tpu_custom_call.1} parent=1 // pred_fallthru
      _
    // Predicated region
    $region118: #{tpu_custom_call.1} parent=1 // pred_check
      _
    $region119: #{tpu_custom_call.1} parent=1 // pred_check_branch
      %882 = sbr.rel (0) target = $region121
    $region120: #{tpu_custom_call.1} parent=1 // pred_region
      %883 = dma.done [#allocation21], 128
    $region121: #{tpu_custom_call.1} parent=1 // pred_fallthru
      _
    %884 = vsyncpa [#allocation3], 1
    %885 = vsyncpa [#allocation6], 1
    %886 = vsyncpa [#allocation9], 1
    %887 = vsyncpa [#allocation12], 1
    %888 = vsyncpa [#allocation15], 1
    %889 = vsyncpa [#allocation4], 1
    %890 = vsyncpa [#allocation18], 1
    %891 = vsyncpa [#allocation21], 1

</llo_original>
